<compile_context>
chip_gen: v6e
topology: v6e:2x2x1
jax: 0.10.0
libtpu: 0.0.40
codegen_flags: <defaults>
</compile_context>

<pallas_src>
import functools

import jax
import jax.numpy as jnp
from jax.experimental import pallas as pl
from jax.experimental.pallas import tpu as pltpu


def _hardsigmoid(x):
    # PyTorch Hardsigmoid: relu6(x + 3) / 6 == clip(x/6 + 0.5, 0, 1)
    return jnp.clip(x * (1.0 / 6.0) + 0.5, 0.0, 1.0)


# ------------------------------------------------ fused single-pass kernel --
def _fused_kernel(x_ref, w_ref, b_ref, o_ref, *, inv_hw):
    # x_ref/o_ref: (1, C, HW)   -- C on sublanes, HW on lanes
    # w_ref      : (C, C)       -- 1x1 conv weight, w[o, c]
    # b_ref      : (C, 1)
    x = x_ref[0]                                                   # (C, HW)
    mean = jnp.sum(x.astype(jnp.float32), axis=-1, keepdims=True) * inv_hw
    pre = jnp.dot(w_ref[...].astype(jnp.float32), mean,
                  preferred_element_type=jnp.float32)
    pre = pre + b_ref[...].astype(jnp.float32)                     # (C, 1)
    gate = _hardsigmoid(pre).astype(x.dtype)                       # (C, 1)
    o_ref[0] = x * gate                                            # broadcast


# ------------------------------------------------------------- pass 1: gate --
def _gate_kernel(x_ref, w_ref, b_ref, g_ref, acc_ref, *, inv_hw):
    # x_ref  : (1, C, hw_tile)
    # g_ref  : (1, C, 1) f32 output gate
    # acc_ref: (C, 1) f32 running sum over HW tiles
    t = pl.program_id(1)

    @pl.when(t == 0)
    def _():
        acc_ref[...] = jnp.zeros_like(acc_ref)

    x = x_ref[0].astype(jnp.float32)                               # (C, hw_tile)
    acc_ref[...] += jnp.sum(x, axis=-1, keepdims=True)             # XLU reduce

    @pl.when(t == pl.num_programs(1) - 1)
    def _():
        mean = acc_ref[...] * inv_hw                               # (C, 1)
        pre = jnp.dot(w_ref[...].astype(jnp.float32), mean,
                      preferred_element_type=jnp.float32)
        pre = pre + b_ref[...].astype(jnp.float32)
        g_ref[0] = _hardsigmoid(pre)


# ------------------------------------------------ pass 2: streaming multiply --
def _scale_kernel(x_ref, g_ref, o_ref):
    # x_ref/o_ref: (1, C, hw_tile); g_ref: (1, C, 1) f32
    gate = g_ref[...].astype(x_ref.dtype)                          # mul in x dtype
    o_ref[...] = (x_ref[...] * gate).astype(o_ref.dtype)


def _pick_hw_tile(HW, C, itemsize, block_budget_bytes=2 * 1024 * 1024):
    """Largest multiple-of-128 divisor of HW whose (C, tile) block fits budget."""
    if HW % 128 != 0:
        return HW                            # odd spatial sizes: one full block
    max_tile = max(128, (block_budget_bytes // max(1, C * itemsize)) // 128 * 128)
    best, t = 128, 128
    while t <= min(HW, max_tile):
        if HW % t == 0:
            best = t
        t += 128
    return best


def effective_se_attention(x_nchw, weight, bias, hw_tile=None,
                           fused_block_budget_bytes=2 * 1024 * 1024):
    """x_nchw: (B, C, H, W); weight: (C, C) squeezed 1x1 conv; bias: (C,)."""
    B, C, H, W = x_nchw.shape
    HW = H * W
    x_flat = x_nchw.reshape(B, C, HW)        # free reshape, native layout
    b_col = bias.reshape(C, 1)
    block_bytes = C * HW * x_nchw.dtype.itemsize

    # ---------- fused path: one HBM read + one write per element ----------
    if hw_tile is None and block_bytes <= fused_block_budget_bytes:
        out = pl.pallas_call(
            functools.partial(_fused_kernel, inv_hw=1.0 / float(HW)),
            out_shape=jax.ShapeDtypeStruct((B, C, HW), x_nchw.dtype),
            grid_spec=pltpu.PrefetchScalarGridSpec(
                num_scalar_prefetch=0,
                grid=(B,),
                in_specs=[
                    pl.BlockSpec((1, C, HW), lambda b: (b, 0, 0)),
                    pl.BlockSpec((C, C), lambda b: (0, 0)),
                    pl.BlockSpec((C, 1), lambda b: (0, 0)),
                ],
                out_specs=pl.BlockSpec((1, C, HW), lambda b: (b, 0, 0)),
            ),
            compiler_params=pltpu.CompilerParams(
                dimension_semantics=("parallel",)),
            input_output_aliases={0: 0},     # in-place scale of x (P8)
        )(x_flat, weight, b_col)
        return out.reshape(B, C, H, W)

    # ---------- streaming two-pass fallback for large C*HW ----------
    if hw_tile is None:
        hw_tile = _pick_hw_tile(HW, C, x_nchw.dtype.itemsize)
    n_t = HW // hw_tile
    assert hw_tile * n_t == HW, "hw_tile must divide H*W"

    # pass 1: gate = hardsigmoid(W @ mean + b)  -> (B, C, 1) f32
    gate = pl.pallas_call(
        functools.partial(_gate_kernel, inv_hw=1.0 / float(HW)),
        out_shape=jax.ShapeDtypeStruct((B, C, 1), jnp.float32),
        grid_spec=pltpu.PrefetchScalarGridSpec(
            num_scalar_prefetch=0,
            grid=(B, n_t),
            in_specs=[
                pl.BlockSpec((1, C, hw_tile), lambda b, t: (b, 0, t)),
                pl.BlockSpec((C, C), lambda b, t: (0, 0)),
                pl.BlockSpec((C, 1), lambda b, t: (0, 0)),
            ],
            out_specs=pl.BlockSpec((1, C, 1), lambda b, t: (b, 0, 0)),
            scratch_shapes=[pltpu.VMEM((C, 1), jnp.float32)],
        ),
        compiler_params=pltpu.CompilerParams(
            dimension_semantics=("parallel", "arbitrary")),
    )(x_flat, weight, b_col)

    # pass 2: lane-dense streaming scale, fully parallel grid
    out = pl.pallas_call(
        _scale_kernel,
        out_shape=jax.ShapeDtypeStruct((B, C, HW), x_nchw.dtype),
        grid_spec=pltpu.PrefetchScalarGridSpec(
            num_scalar_prefetch=0,
            grid=(B, n_t),
            in_specs=[
                pl.BlockSpec((1, C, hw_tile), lambda b, t: (b, 0, t)),
                pl.BlockSpec((1, C, 1), lambda b, t: (b, 0, 0)),
            ],
            out_specs=pl.BlockSpec((1, C, hw_tile), lambda b, t: (b, 0, t)),
        ),
        compiler_params=pltpu.CompilerParams(
            dimension_semantics=("parallel", "parallel")),
        input_output_aliases={0: 0},         # in-place scale of x (P8)
    )(x_flat, gate)

    return out.reshape(B, C, H, W)


def _reference(x_nchw, weight, bias):
    # pure-JAX reference of the PyTorch forward
    m = jnp.mean(x_nchw, axis=(2, 3), keepdims=True)                 # (B,C,1,1)
    y = jnp.einsum('oc,bcij->boij', weight, m) + bias[None, :, None, None]
    gate = jnp.clip(y / 6.0 + 0.5, 0.0, 1.0)
    return x_nchw * gate


if __name__ == "__main__":
    key = jax.random.PRNGKey(0)
    k_x, k_w, k_b = jax.random.split(key, 3)

    B, C, H, W = 2, 4, 16, 16
    x = jax.random.normal(k_x, (B, C, H, W), dtype=jnp.float32)
    # deterministic 1x1-conv params (Conv2d(C, C, 1) -> weight (C, C), bias (C,))
    fan_in = C
    bound = 1.0 / (fan_in ** 0.5)
    weight = jax.random.uniform(k_w, (C, C), minval=-bound, maxval=bound,
                                dtype=jnp.float32)
    bias = jax.random.uniform(k_b, (C,), minval=-bound, maxval=bound,
                              dtype=jnp.float32)

    ref = _reference(x, weight, bias)

    # fused single-pass path (default at this size)
    out = jax.block_until_ready(jax.jit(effective_se_attention)(x, weight, bias))
    assert out.shape == (B, C, H, W)
    assert jnp.allclose(out, ref, atol=1e-5, rtol=1e-5), "mismatch (fused path)"

    # exercise the streaming two-pass path (hw_tile=128 -> 2 HW tiles/batch)
    out2 = jax.block_until_ready(
        jax.jit(functools.partial(effective_se_attention, hw_tile=128))(
            x, weight, bias))
    assert jnp.allclose(out2, ref, atol=1e-5, rtol=1e-5), "mismatch (tiled path)"

    print("KERNEL_OK")
</pallas_src>

<mosaic_0001>
module attributes {stable_mosaic.version = 11 : i64} {
  func.func @_fused_kernel(%arg0: i32, %arg1: memref<1x4x256xf32, #tpu.memory_space<vmem>>, %arg2: memref<4x4xf32, #tpu.memory_space<vmem>>, %arg3: memref<4x1xf32, #tpu.memory_space<vmem>>, %arg4: memref<1x4x256xf32, #tpu.memory_space<vmem>>) attributes {dimension_semantics = [#tpu.dimension_semantics<parallel>], iteration_bounds = array<i64: 2>, scalar_prefetch = 0 : i64, scratch_operands = 0 : i64, tpu.core_type = #tpu.core_type<tc>, window_params = [{transform_indices = @transform_0, window_bounds = array<i64: 1, 4, 256>}, {pipeline_mode = #tpu.pipeline_mode<synchronous>, transform_indices = @transform_1, window_bounds = array<i64: 4, 4>}, {pipeline_mode = #tpu.pipeline_mode<synchronous>, transform_indices = @transform_2, window_bounds = array<i64: 4, 1>}, {transform_indices = @transform_3, window_bounds = array<i64: 1, 4, 256>}]} {
    %c0 = arith.constant 0 : index
    %c0_0 = arith.constant 0 : index
    %c0_1 = arith.constant 0 : index
    %0 = vector.load %arg1[%c0, %c0_0, %c0_1] : memref<1x4x256xf32, #tpu.memory_space<vmem>>, vector<1x4x256xf32>
    %1 = vector.shape_cast %0 : vector<1x4x256xf32> to vector<4x256xf32>
    %cst = arith.constant dense<0.000000e+00> : vector<4xf32>
    %2 = vector.multi_reduction <add>, %1, %cst [1] : vector<4x256xf32> to vector<4xf32>
    %3 = vector.shape_cast %2 : vector<4xf32> to vector<4x1xf32>
    %cst_2 = arith.constant 3.906250e-03 : f32
    %4 = vector.broadcast %cst_2 : f32 to vector<4x1xf32>
    %5 = arith.mulf %3, %4 : vector<4x1xf32>
    %c0_3 = arith.constant 0 : index
    %c0_4 = arith.constant 0 : index
    %6 = vector.load %arg2[%c0_3, %c0_4] : memref<4x4xf32, #tpu.memory_space<vmem>>, vector<4x4xf32>
    %cst_5 = arith.constant dense<0.000000e+00> : vector<4x1xf32>
    %7 = tpu.matmul %6, %5, %cst_5 {dimension_numbers = #tpu.dot_dimension_numbers<[1], [0], [0], [1], [0, 0, 1, 1], [], []>} : vector<4x4xf32>, vector<4x1xf32>, vector<4x1xf32> -> vector<4x1xf32>
    %c0_6 = arith.constant 0 : index
    %c0_7 = arith.constant 0 : index
    %8 = vector.load %arg3[%c0_6, %c0_7] : memref<4x1xf32, #tpu.memory_space<vmem>>, vector<4x1xf32>
    %9 = arith.addf %7, %8 : vector<4x1xf32>
    %cst_8 = arith.constant 0.166666672 : f32
    %10 = vector.broadcast %cst_8 : f32 to vector<4x1xf32>
    %11 = arith.mulf %9, %10 : vector<4x1xf32>
    %cst_9 = arith.constant 5.000000e-01 : f32
    %12 = vector.broadcast %cst_9 : f32 to vector<4x1xf32>
    %13 = arith.addf %11, %12 : vector<4x1xf32>
    %cst_10 = arith.constant 0.000000e+00 : f32
    %cst_11 = arith.constant 1.000000e+00 : f32
    %14 = vector.broadcast %cst_10 : f32 to vector<4x1xf32>
    %15 = arith.maximumf %14, %13 : vector<4x1xf32>
    %16 = vector.broadcast %cst_11 : f32 to vector<4x1xf32>
    %17 = arith.minimumf %16, %15 : vector<4x1xf32>
    %18 = vector.broadcast %17 : vector<4x1xf32> to vector<4x256xf32>
    %19 = arith.mulf %1, %18 : vector<4x256xf32>
    %c0_12 = arith.constant 0 : index
    %c0_13 = arith.constant 0 : index
    %c0_14 = arith.constant 0 : index
    %20 = vector.load %arg4[%c0_12, %c0_13, %c0_14] : memref<1x4x256xf32, #tpu.memory_space<vmem>>, vector<1x4x256xf32>
    %21 = vector.shape_cast %20 : vector<1x4x256xf32> to vector<4x256xf32>
    %22 = vector.shape_cast %19 : vector<4x256xf32> to vector<1x4x256xf32>
    tpu.vector_store %arg4[%c0_12, %c0_13, %c0_14], %22 {strides = array<i32>} : memref<1x4x256xf32, #tpu.memory_space<vmem>>, vector<1x4x256xf32>,
    return
  }
  func.func @transform_0(%arg0: i32) -> (i32, i32, i32) {
    %c0_i32 = arith.constant 0 : i32
    %c0_i32_0 = arith.constant 0 : i32
    %c0_i32_1 = arith.constant 0 : i32
    return %arg0, %c0_i32, %c0_i32_0 : i32, i32, i32
  }
  func.func @transform_1(%arg0: i32) -> (i32, i32) {
    %c0_i32 = arith.constant 0 : i32
    %c0_i32_0 = arith.constant 0 : i32
    %c0_i32_1 = arith.constant 0 : i32
    return %c0_i32, %c0_i32_0 : i32, i32
  }
  func.func @transform_2(%arg0: i32) -> (i32, i32) {
    %c0_i32 = arith.constant 0 : i32
    %c0_i32_0 = arith.constant 0 : i32
    %c0_i32_1 = arith.constant 0 : i32
    return %c0_i32, %c0_i32_0 : i32, i32
  }
  func.func @transform_3(%arg0: i32) -> (i32, i32, i32) {
    %c0_i32 = arith.constant 0 : i32
    %c0_i32_0 = arith.constant 0 : i32
    %c0_i32_1 = arith.constant 0 : i32
    return %arg0, %c0_i32, %c0_i32_0 : i32, i32, i32
  }
}

</mosaic_0001>

<llo_original>
// kernel: effective_se_attention.1
$region0: #{effective_se_attention.1}
  #allocation0 [shape = 'u32[]', space=smem, size = 0x4, offset = 0x4, fixed_abs, tag = 'smem constant byte address 0x4 - core index']
  #allocation1 [shape = 'u32[144,128]{1,0:T(1,128)}', space=vmem, size = 0x12000, scoped, tag = 'internal scratch']
  %s0 = inlined_call_operand.vmem [shape: f32[2,4,256], index: 0, kind: input, shape index: {}, may-alias: {0,3}]
  %s1 = inlined_call_operand.vmem [shape: f32[4,4], index: 1, kind: input, shape index: {}]
  %s2 = inlined_call_operand.vmem [shape: f32[4,1], index: 2, kind: input, shape index: {}]
  %s3 = inlined_call_operand.vmem [shape: f32[2,4,256], index: 3, kind: output, shape index: {}, may-alias: {0,3}]
  %s4 = sld [smem:[#allocation0]]
  $region45: #{effective_se_attention.1} parent=0
    _
  %s6 = ssub.s32 1, %s4
  %s7 = scalar_select 0, %s6, %s4
  loop: start=0, step=1, limit=4
  $region2: #{effective_se_attention.1} parent=0 // loop_pre_header
    _
  $region3: #{effective_se_attention.1} parent=0 // loop_header
    %s9 = sphi 0, %s13
    %p10 = scmp.ge.s32.totalorder %s9, 4
    %s19 = sphi 0, %s21
    %s22 = sphi 0, %s19
    %s23 = sphi 0, %s22
    %s39 = sphi 0, %s23
    %s43 = sphi 0, %s43
    %s45 = sphi 0, %s43
    %s46 = sphi 0, %s45
    %s60 = sphi 0, %s46
    %s64 = sphi 0, %s64
    %s66 = sphi 0, %s64
    %s67 = sphi 0, %s66
    %s81 = sphi 0, %s67
    %s87 = sphi 0, %s89
    %s90 = sphi 0, %s87
    %s91 = sphi 0, %s90
    %s107 = sphi 0, %s91
  $region4: #{effective_se_attention.1} parent=0 // loop_header_branch
    %12 = sbr.rel (%p10) target = $region8
  $region5: #{effective_se_attention.1} parent=0 // loop_body
    %s14 = ssub.s32 %s9, 1
    %s15 = ssub.s32 %s9, 2
    %s16 = sadd.s32 %s9, 1
    %s17 = ssub.s32 %s9, %s16
    %p18 = scmp.eq.s32.totalorder %s17, 0
    %s20 = sadd.s32 %s19, 1
    %s21 = scalar_select %p18, %s19, %s20
    %p24 = pneg %p18
    %p25 = scmp.eq.s32.totalorder %s9, 1
    %p26 = por %p24, %p25
    %p27 = scmp.ne.s32.totalorder %s19, %s22
    %p28 = scmp.eq.s32.totalorder %s9, 0
    %p29 = por %p27, %p28
    %p30 = scmp.ne.s32.totalorder %s19, %s22
    %p31 = scmp.eq.s32.totalorder %s14, 1
    %p32 = por %p30, %p31
    %p33 = scmp.ne.s32.totalorder %s22, %s23
    %p34 = scmp.eq.s32.totalorder %s14, 0
    %p35 = por %p33, %p34
    %p36 = scmp.ne.s32.totalorder %s22, %s23
    %p37 = scmp.eq.s32.totalorder %s15, 1
    %p38 = por %p36, %p37
    %p40 = scmp.ne.s32.totalorder %s23, %s39
    %p41 = scmp.eq.s32.totalorder %s15, 0
    %p42 = por %p40, %p41
    %s44 = sadd.s32 %s43, 1
    %p47 = scmp.eq.s32.totalorder %s9, 1
    %p48 = scmp.ne.s32.totalorder %s43, %s45
    %p49 = scmp.eq.s32.totalorder %s9, 0
    %p50 = por %p48, %p49
    %p51 = scmp.ne.s32.totalorder %s43, %s45
    %p52 = scmp.eq.s32.totalorder %s14, 1
    %p53 = por %p51, %p52
    %p54 = scmp.ne.s32.totalorder %s45, %s46
    %p55 = scmp.eq.s32.totalorder %s14, 0
    %p56 = por %p54, %p55
    %p57 = scmp.ne.s32.totalorder %s45, %s46
    %p58 = scmp.eq.s32.totalorder %s15, 1
    %p59 = por %p57, %p58
    %p61 = scmp.ne.s32.totalorder %s46, %s60
    %p62 = scmp.eq.s32.totalorder %s15, 0
    %p63 = por %p61, %p62
    %s65 = sadd.s32 %s64, 1
    %p68 = scmp.eq.s32.totalorder %s9, 1
    %p69 = scmp.ne.s32.totalorder %s64, %s66
    %p70 = scmp.eq.s32.totalorder %s9, 0
    %p71 = por %p69, %p70
    %p72 = scmp.ne.s32.totalorder %s64, %s66
    %p73 = scmp.eq.s32.totalorder %s14, 1
    %p74 = por %p72, %p73
    %p75 = scmp.ne.s32.totalorder %s66, %s67
    %p76 = scmp.eq.s32.totalorder %s14, 0
    %p77 = por %p75, %p76
    %p78 = scmp.ne.s32.totalorder %s66, %s67
    %p79 = scmp.eq.s32.totalorder %s15, 1
    %p80 = por %p78, %p79
    %p82 = scmp.ne.s32.totalorder %s67, %s81
    %p83 = scmp.eq.s32.totalorder %s15, 0
    %p84 = por %p82, %p83
    %s85 = ssub.s32 %s9, %s16
    %p86 = scmp.eq.s32.totalorder %s85, 0
    %s88 = sadd.s32 %s87, 1
    %s89 = scalar_select %p86, %s87, %s88
    %p92 = pneg %p86
    %p93 = scmp.eq.s32.totalorder %s9, 1
    %p94 = por %p92, %p93
    %p95 = scmp.ne.s32.totalorder %s87, %s90
    %p96 = scmp.eq.s32.totalorder %s9, 0
    %p97 = por %p95, %p96
    %p98 = scmp.ne.s32.totalorder %s87, %s90
    %p99 = scmp.eq.s32.totalorder %s14, 1
    %p100 = por %p98, %p99
    %p101 = scmp.ne.s32.totalorder %s90, %s91
    %p102 = scmp.eq.s32.totalorder %s14, 0
    %p103 = por %p101, %p102
    %p104 = scmp.ne.s32.totalorder %s90, %s91
    %p105 = scmp.eq.s32.totalorder %s15, 1
    %p106 = por %p104, %p105
    %p108 = scmp.ne.s32.totalorder %s91, %s107
    %p109 = scmp.eq.s32.totalorder %s15, 0
    %p110 = por %p108, %p109
    %p111 = scmp.le.s32.totalorder 1, %s9
    %p112 = scmp.lt.s32.totalorder %s9, 3
    %p113 = pnand %p111, %p112
    %p114 = pneg %p113
    // Predicated region
    $region9: #{effective_se_attention.1} parent=5 // pred_check
      _
    $region10: #{effective_se_attention.1} parent=5 // pred_check_branch
      %116 = sbr.rel (%p113) target = $region12
    $region11: #{effective_se_attention.1} parent=5 // pred_region
      %s117 = ssub.s32 %s9, 1
      // Predicated region
      $region13: #{effective_se_attention.1} parent=11 // pred_check
        %p118 = pneg %p56
      $region14: #{effective_se_attention.1} parent=11 // pred_check_branch
        %120 = sbr.rel (%p118) target = $region16
      $region15: #{effective_se_attention.1} parent=11 // pred_region
        _
      $region16: #{effective_se_attention.1} parent=11 // pred_fallthru
        _
      // Predicated region
      $region17: #{effective_se_attention.1} parent=11 // pred_check
        %p121 = pneg %p77
      $region18: #{effective_se_attention.1} parent=11 // pred_check_branch
        %123 = sbr.rel (%p121) target = $region20
      $region19: #{effective_se_attention.1} parent=11 // pred_region
        _
      $region20: #{effective_se_attention.1} parent=11 // pred_fallthru
        _
    $region12: #{effective_se_attention.1} parent=5 // pred_fallthru
      _
    %p124 = scmp.lt.s32.totalorder %s9, 2
    // Predicated region
    $region21: #{effective_se_attention.1} parent=5 // pred_check
      %p125 = pneg %p124
    $region22: #{effective_se_attention.1} parent=5 // pred_check_branch
      %127 = sbr.rel (%p125) target = $region24
    $region23: #{effective_se_attention.1} parent=5 // pred_region
      // Predicated region
      $region25: #{effective_se_attention.1} parent=23 // pred_check
        %p128 = pneg %p29
      $region26: #{effective_se_attention.1} parent=23 // pred_check_branch
        %130 = sbr.rel (%p128) target = $region28
      $region27: #{effective_se_attention.1} parent=23 // pred_region
        %p131 = scmp.lt.s32.totalorder %s9, 1
        %s132 = scalar_select %p131, %s9, 1
        %s133 = smul.addr %s132, 2
        %s134 = smul.addr %s133, 4
        %s135 = scalar_lea.vmem %s0, %s134
      $region28: #{effective_se_attention.1} parent=23 // pred_fallthru
        _
    $region24: #{effective_se_attention.1} parent=5 // pred_fallthru
      _
    %p136 = scmp.le.s32.totalorder 1, %s9
    %p137 = scmp.lt.s32.totalorder %s9, 3
    %p138 = pnand %p136, %p137
    %p139 = pneg %p138
    // Predicated region
    $region29: #{effective_se_attention.1} parent=5 // pred_check
      _
    $region30: #{effective_se_attention.1} parent=5 // pred_check_branch
      %141 = sbr.rel (%p138) target = $region32
    $region31: #{effective_se_attention.1} parent=5 // pred_region
      %s142 = ssub.s32 %s9, 1
      %p143 = scmp.lt.s32.totalorder %s14, 1
      %s144 = scalar_select %p143, %s14, 1
      %s145 = smul.addr %s144, 2
      %s146 = smul.addr %s145, 4
      %s147 = scalar_lea.vmem %s0, %s146
      %p148 = pneg %p35
      %p149 = pneg %p32
      %p150 = pneg %p56
      %p151 = pneg %p53
      %p152 = pneg %p77
      %p153 = pneg %p74
      %p154 = pneg %p103
      %p155 = pneg %p100
      %p156 = scmp.lt.s32.totalorder %s14, 1
      %s157 = scalar_select %p156, %s14, 1
      %s158 = smul.addr %s157, 2
      %s159 = smul.addr %s158, 4
      %s160 = scalar_lea.vmem %s3, %s159
      %p161 = scmp.lt.s32.totalorder %s14, 1
      %s162 = scalar_select %p161, %s14, 1
      %s163 = smul.addr %s162, 2
      %s164 = smul.addr %s163, 4
      %s165 = scalar_lea.vmem %s0, %s164
      %p166 = scmp.lt.s32.totalorder %s14, 1
      %s167 = scalar_select %p166, %s14, 1
      %s168 = smul.addr %s167, 2
      %s169 = smul.addr %s168, 4
      %s170 = scalar_lea.vmem %s3, %s169
      %v171 = vld [vmem:[%s165] sm:$0xff]
      %v173 = vcombine.high %v171, %v171
      %vm175 = vcmask 1043456
      %v176 = vsel %vm175, %v171, 0.0
      %v177 = vsel %vm175, %v173, 0.0
      %v178 = vadd.f32 %v176, %v177
      %179 = vadd.xlane.f32.xlu0 %v178
      %v180 = vpop.xlane.xlu0 %179
      %v181 = vmul.f32 %v180, 0.00390625
      %v182 = vld [vmem:[%s1] sm:$0xf]
      %v183 = vld [vmem:[%s2] sm:$0xf]
      %vm184 = vcmask 31744
      %v186 = vsel %vm184, %v182, 0
      %v189 = vsel %vm175, %v181, 0
      %191 = vmatprep.subr.mxu0 0.0
      %192 = vmatpush1.msra.mxu0 0.0
      %193 = vmatprep.subr.mxu0 0.0
      %194 = vmatpush1.msra.mxu0 0.0
      %195 = vmatprep.subr.mxu0 0.0
      %196 = vmatpush1.msra.mxu0 0.0
      %197 = vmatprep.subr.mxu0 0.0
      %198 = vmatpush1.msra.mxu0 0.0
      %199 = vmatprep.subr.mxu0 0.0
      %200 = vmatpush1.msra.mxu0 0.0
      %201 = vmatprep.subr.mxu0 0.0
      %202 = vmatpush1.msra.mxu0 0.0
      %203 = vmatprep.subr.mxu0 0.0
      %204 = vmatpush1.msra.mxu0 0.0
      %205 = vmatprep.subr.mxu0 0.0
      %206 = vmatpush1.msra.mxu0 0.0
      %207 = vmatprep.subr.mxu0 0.0
      %208 = vmatpush1.msra.mxu0 0.0
      %209 = vmatprep.subr.mxu0 0.0
      %210 = vmatpush1.msra.mxu0 0.0
      %211 = vmatprep.subr.mxu0 0.0
      %212 = vmatpush1.msra.mxu0 0.0
      %213 = vmatprep.subr.mxu0 0.0
      %214 = vmatpush1.msra.mxu0 0.0
      %215 = vmatprep.subr.mxu0 0.0
      %216 = vmatpush1.msra.mxu0 0.0
      %217 = vmatprep.subr.mxu0 0.0
      %218 = vmatpush1.msra.mxu0 0.0
      %219 = vmatprep.subr.mxu0 0.0
      %220 = vmatpush1.msra.mxu0 0.0
      %221 = vmatprep.subr.mxu0 0.0
      %222 = vmatpush1.msra.mxu0 %v189
      %223 = vmatprep.subr.mxu0 0.0
      %224 = vmatpush2.msra.mxu0 0.0
      %225 = vmatprep.subr.mxu0 0.0
      %226 = vmatpush2.msra.mxu0 0.0
      %227 = vmatprep.subr.mxu0 0.0
      %228 = vmatpush2.msra.mxu0 0.0
      %229 = vmatprep.subr.mxu0 0.0
      %230 = vmatpush2.msra.mxu0 0.0
      %231 = vmatprep.subr.mxu0 0.0
      %232 = vmatpush2.msra.mxu0 0.0
      %233 = vmatprep.subr.mxu0 0.0
      %234 = vmatpush2.msra.mxu0 0.0
      %235 = vmatprep.subr.mxu0 0.0
      %236 = vmatpush2.msra.mxu0 0.0
      %237 = vmatprep.subr.mxu0 0.0
      %238 = vmatpush2.msra.mxu0 0.0
      %239 = vmatprep.subr.mxu0 0.0
      %240 = vmatpush2.msra.mxu0 0.0
      %241 = vmatprep.subr.mxu0 0.0
      %242 = vmatpush2.msra.mxu0 0.0
      %243 = vmatprep.subr.mxu0 0.0
      %244 = vmatpush2.msra.mxu0 0.0
      %245 = vmatprep.subr.mxu0 0.0
      %246 = vmatpush2.msra.mxu0 0.0
      %247 = vmatprep.subr.mxu0 0.0
      %248 = vmatpush2.msra.mxu0 0.0
      %249 = vmatprep.subr.mxu0 0.0
      %250 = vmatpush2.msra.mxu0 0.0
      %251 = vmatprep.subr.mxu0 0.0
      %252 = vmatpush2.msra.mxu0 0.0
      %253 = vmatprep.subr.mxu0 0.0
      %254 = vmatpush2.msra.mxu0 0.0
      %255 = vmatprep.mubr.f32.mxu0 0.0
      %256 = vmatmul.mubr.f32.gmra.mxu0 %v186
      %v257 = vpop.f32.mrf.mxu0
      %v258 = vadd.f32 %v183, %v257
      %v259 = vpop.f32.mrf.mxu0
      %260 = vdwg.mxu0
      %v261 = vmul.f32 %v258, 0.16666667
      %v262 = vadd.f32 %v261, 0.5
      %v263 = vmax.f32 %v262, 0.0
      %v264 = vmin.f32 %v263, 1.0
      %266 = vset.pattern.permute.xlu0 0
      %267 = vperm.xlu0 %266, %v264
      %v268 = vpop.permute.xlu0 %267
      %v270 = vunpack.c.l.s4 839922192
      %v271 = vunpack.c.0.s8 %v270
      %v272 = vlaneseq
      %v273 = vshrl.u32 %v272, 7
      %v274 = vsub.s32 %v271, %v273
      %v275 = vrot.slane %v268, %v274
      %v277 = vmul.f32 %v171, %v275
      %278 = vst [vmem:[%s170] sm:$0xff] %v277
      %p279 = scmp.lt.s32.totalorder %s14, 1
      %s280 = scalar_select %p279, %s14, 1
      %s281 = smul.addr %s280, 2
      %s282 = smul.addr %s281, 4
      %s283 = scalar_lea.vmem %s3, %s282
      // Predicated region
      $region33: #{effective_se_attention.1} parent=31 // pred_check
        %p284 = pneg %p100
      $region34: #{effective_se_attention.1} parent=31 // pred_check_branch
        %286 = sbr.rel (%p284) target = $region36
      $region35: #{effective_se_attention.1} parent=31 // pred_region
        _
      $region36: #{effective_se_attention.1} parent=31 // pred_fallthru
        _
    $region32: #{effective_se_attention.1} parent=5 // pred_fallthru
      _
    %p287 = scmp.le.s32.totalorder 2, %s9
    // Predicated region
    $region37: #{effective_se_attention.1} parent=5 // pred_check
      %p288 = pneg %p287
    $region38: #{effective_se_attention.1} parent=5 // pred_check_branch
      %290 = sbr.rel (%p288) target = $region40
    $region39: #{effective_se_attention.1} parent=5 // pred_region
      %s291 = ssub.s32 %s9, 2
      // Predicated region
      $region41: #{effective_se_attention.1} parent=39 // pred_check
        %p292 = pneg %p106
      $region42: #{effective_se_attention.1} parent=39 // pred_check_branch
        %294 = sbr.rel (%p292) target = $region44
      $region43: #{effective_se_attention.1} parent=39 // pred_region
        %p295 = scmp.lt.s32.totalorder %s15, 1
        %s296 = scalar_select %p295, %s15, 1
        %s297 = smul.addr %s296, 2
        %s298 = smul.addr %s297, 4
        %s299 = scalar_lea.vmem %s3, %s298
      $region44: #{effective_se_attention.1} parent=39 // pred_fallthru
        _
    $region40: #{effective_se_attention.1} parent=5 // pred_fallthru
      _
  $region6: #{effective_se_attention.1} parent=0 // loop_footer
    %s13 = sadd.s32 1, %s9
  $region7: #{effective_se_attention.1} parent=0 // loop_footer_branch
    %8 = sbr.rel target = $region3
  $region8: #{effective_se_attention.1} parent=0 // loop_exit
    _

</llo_original>
